<compile_context>
chip_gen: v7x
topology: tpu7x:2x2x1
jax: 0.10.0
libtpu: 0.0.40
codegen_flags: <defaults>
</compile_context>

<pallas_src>
import math

import jax
import jax.numpy as jnp
from jax.experimental import pallas as pl
from jax.experimental.pallas import tpu as pltpu

_LANE = 128
_SUBLANE = 8
# Problems at or below this many f32 elements (256 KiB) run as a single grid
# step: the ~0.35 us per-step overhead outweighs any pipeline/megacore win.
_SMALL_SINGLE_BLOCK_ELEMS = 64 * 1024
# Inputs at or below this many BYTES skip Pallas entirely (fused XLA add is
# strictly faster than the pallas_call launch + DMA setup at tiny sizes).
_TINY_XLA_BYTES = 256 * 1024


def _build_pe(d_model: int, max_len: int = 100) -> jnp.ndarray:
    """Deterministic sinusoidal positional-encoding buffer, shape (1, max_len, d_model)."""
    position = jnp.arange(max_len, dtype=jnp.float32)[:, None]               # (max_len, 1)
    div_term = jnp.exp(
        jnp.arange(0, d_model, 2, dtype=jnp.float32) * (-math.log(10000.0) / d_model)
    )                                                                         # (ceil(d/2),)
    angles = position * div_term                                              # (max_len, ceil(d/2))
    pe = jnp.zeros((max_len, d_model), dtype=jnp.float32)
    pe = pe.at[:, 0::2].set(jnp.sin(angles))
    # Handle odd d_model: the cos half only has floor(d/2) columns.
    pe = pe.at[:, 1::2].set(jnp.cos(angles[:, : d_model // 2]))
    return pe[None, :, :]                                                     # (1, max_len, d_model)


def _add_pe_kernel(x_ref, pe_ref, o_ref):
    # Works for both layouts:
    #   fast path:  x (TB, TF)    + pe (1, TF)     -> broadcast over rows
    #   fallback :  x (TB, TS, D) + pe (1, TS, D)  -> broadcast over batch
    o_ref[...] = x_ref[...] + pe_ref[...]


def _vmem_budget():
    """(max f32 elems per x/out block, vmem_limit_bytes), derived per chip generation.

    Working set per grid step is roughly 2*(x block) + 2*(out block) + 2*(pe
    block) <= 6 * block, which stays well inside the returned vmem_limit on
    every generation.
    """
    vmem_bytes = None
    try:
        vmem_bytes = getattr(pltpu.get_tpu_info(), "vmem_capacity_bytes", None)
    except Exception:
        vmem_bytes = None
    if vmem_bytes is None:
        vmem_bytes = 64 * 1024 * 1024            # conservative: v7x per-TensorCore VMEM
    if vmem_bytes >= 96 * 1024 * 1024:           # v5e / v6e: 128 MiB physical VMEM
        # 4 MiB x/out blocks sit on the measured HBM-roofline plateau (~86%).
        return 1024 * 1024, 64 * 1024 * 1024
    # v7x: 64 MiB physical / 32 MiB scoped -> keep blocks at ~2 MiB.
    return 512 * 1024, 32 * 1024 * 1024


def _round_down(x: int, m: int) -> int:
    return (x // m) * m


def _choose_tiles_flat(b: int, feat: int, budget: int):
    """Tile sizes (tb, tf) for the flattened (b, feat) layout, or None if the
    layout cannot be tiled legally (needs tb % 8 == 0 or tb == b, and
    tf % 128 == 0 or tf == feat)."""
    total = b * feat

    # Tiny problem: one block, one grid step.
    if total <= min(budget, _SMALL_SINGLE_BLOCK_ELEMS):
        return b, feat

    if feat <= budget:
        cap = budget // feat                      # full rows per block within budget
        if b <= cap:
            # Whole problem fits in one block but is not tiny: split one axis
            # in two so both v7x TensorCores get work and the input fetch
            # overlaps the output writeback.
            if b >= 2 * _SUBLANE:
                return _round_down(pl.cdiv(b, 2), _SUBLANE), feat
            if feat % (2 * _LANE) == 0:
                return b, feat // 2
            return b, feat                        # cannot split legally; single block
        if cap >= _SUBLANE:
            return _round_down(cap, _SUBLANE), feat
        # Fewer than 8 full rows fit: a sublane tile < 8 would be illegal, and
        # rounding UP to 8 would blow past the VMEM budget -> shrink tf instead
        # (requires a 128-aligned feature axis to split).
        if feat % _LANE == 0:
            tb = _SUBLANE if b >= _SUBLANE else b
            tf = min(feat, max(_LANE, _round_down(budget // tb, _LANE)))
            return tb, tf
        return None

    # feat itself exceeds the block budget: the feature axis must be split,
    # which requires 128-aligned tf.
    if feat % _LANE != 0:
        return None
    tb = _SUBLANE if b >= _SUBLANE else b
    tf = min(feat, max(_LANE, _round_down(budget // tb, _LANE)))
    return tb, tf


def positional_encoding(x: jnp.ndarray, pe: jnp.ndarray, *,
                        min_pallas_bytes: int = _TINY_XLA_BYTES) -> jnp.ndarray:
    """x: (batch, seq, d_model) f32; pe: (1, max_len, d_model) f32.

    Returns x + pe[:, :seq].  Inputs whose total size is <= `min_pallas_bytes`
    use a fused XLA add (launch overhead dominates there); pass 0 to force the
    Pallas kernel.
    """
    b, s, d = x.shape
    max_len = pe.shape[1]
    if s > max_len:
        raise ValueError(f"seq_len={s} exceeds positional-encoding max_len={max_len}")
    if pe.shape[2] != d:
        raise ValueError(f"d_model mismatch: x has {d}, pe has {pe.shape[2]}")

    pe_slice = pe[:, :s, :]  # glue: slice the buffer to the input sequence length

    if b * s * d * x.dtype.itemsize <= min_pallas_bytes:
        # Tiny input: fused XLA add is strictly faster than a pallas_call.
        return x + pe_slice

    budget, vmem_limit = _vmem_budget()
    compiler_params = pltpu.CompilerParams(
        dimension_semantics=("parallel", "parallel"),
        vmem_limit_bytes=vmem_limit,
    )
    cost = pl.CostEstimate(
        flops=b * s * d,
        transcendentals=0,
        bytes_accessed=(2 * b * s * d + s * d) * x.dtype.itemsize,
    )

    feat = s * d
    tiles = _choose_tiles_flat(b, feat, budget)

    if tiles is not None:
        # ---- Lane-dense fast path: flatten (s, d) -> feat ---------------------
        tb, tf = tiles
        x2 = x.reshape(b, feat)
        pe2 = pe_slice.reshape(1, feat)
        grid = (pl.cdiv(feat, tf), pl.cdiv(b, tb))  # feature tiles OUTER -> pe stays resident

        out = pl.pallas_call(
            _add_pe_kernel,
            out_shape=jax.ShapeDtypeStruct((b, feat), x.dtype),
            grid_spec=pltpu.PrefetchScalarGridSpec(
                num_scalar_prefetch=0,
                grid=grid,
                in_specs=[
                    pl.BlockSpec((tb, tf), lambda j, i: (i, j)),   # x tile
                    pl.BlockSpec((1, tf), lambda j, i: (0, j)),    # shared pe tile
                ],
                out_specs=pl.BlockSpec((tb, tf), lambda j, i: (i, j)),
            ),
            compiler_params=compiler_params,
            cost_estimate=cost,
        )(x2, pe2)
        return out.reshape(b, s, d)

    # ---- 3-D fallback: only when feat > block budget AND feat is not 128-aligned.
    row = s * d
    if row <= budget:
        ts = s
        tb = max(1, min(b, budget // row))         # leading dim: no (8,128) constraint
    else:
        tb = 1
        ts = min(s, max(_SUBLANE, _round_down(budget // d, _SUBLANE)))
    grid = (pl.cdiv(s, ts), pl.cdiv(b, tb))        # seq tiles OUTER -> pe stays resident

    return pl.pallas_call(
        _add_pe_kernel,
        out_shape=jax.ShapeDtypeStruct((b, s, d), x.dtype),
        grid_spec=pltpu.PrefetchScalarGridSpec(
            num_scalar_prefetch=0,
            grid=grid,
            in_specs=[
                pl.BlockSpec((tb, ts, d), lambda j, i: (i, j, 0)),  # x tile
                pl.BlockSpec((1, ts, d), lambda j, i: (0, j, 0)),   # shared pe tile
            ],
            out_specs=pl.BlockSpec((tb, ts, d), lambda j, i: (i, j, 0)),
        ),
        compiler_params=compiler_params,
        cost_estimate=cost,
    )(x, pe_slice)


if __name__ == "__main__":
    key = jax.random.PRNGKey(0)

    # 1) Module-sized demo shape (batch=2, seq=8, d_model=32).  By default this
    #    tiny input takes the fused-XLA bypass; we also force it through the
    #    Pallas kernel to validate that path.
    batch, seq, d_model = 2, 8, 32
    pe = _build_pe(d_model, max_len=100)
    x = jax.random.normal(key, (batch, seq, d_model), dtype=jnp.float32)
    ref = x + pe[:, :seq]

    out_default = jax.block_until_ready(positional_encoding(x, pe))
    out_kernel = jax.block_until_ready(positional_encoding(x, pe, min_pallas_bytes=0))
    assert out_kernel.shape == (batch, seq, d_model)
    assert jnp.allclose(out_default, ref, atol=1e-6), "mismatch vs reference (XLA bypass)"
    assert jnp.allclose(out_kernel, ref, atol=1e-6), "mismatch vs reference (kernel path)"

    # 2) Medium shape: exercises the multi-tile lane-dense path (>=2 batch tiles
    #    so both v7x TensorCores get work).
    b2, s2, d2 = 16, 64, 128
    x2 = jax.random.normal(jax.random.PRNGKey(1), (b2, s2, d2), dtype=jnp.float32)
    pe2 = _build_pe(d2, max_len=100)
    out2 = jax.block_until_ready(positional_encoding(x2, pe2, min_pallas_bytes=0))
    assert jnp.allclose(out2, x2 + pe2[:, :s2], atol=1e-6), "mismatch vs reference (medium)"

    # 3) Odd d_model: exercises the full-row (tf == feat) non-128-aligned flat path.
    b3, s3, d3 = 4, 32, 33
    x3 = jax.random.normal(jax.random.PRNGKey(2), (b3, s3, d3), dtype=jnp.float32)
    pe3 = _build_pe(d3, max_len=100)
    out3 = jax.block_until_ready(positional_encoding(x3, pe3, min_pallas_bytes=0))
    assert jnp.allclose(out3, x3 + pe3[:, :s3], atol=1e-6), "mismatch vs reference (odd d)"

    print("KERNEL_OK")
</pallas_src>

<mosaic_0001>
module attributes {stable_mosaic.version = 11 : i64} {
  func.func @_add_pe_kernel(%arg0: i32, %arg1: i32, %arg2: memref<2x256xf32, #tpu.memory_space<vmem>>, %arg3: memref<1x256xf32, #tpu.memory_space<vmem>>, %arg4: memref<2x256xf32, #tpu.memory_space<vmem>>) attributes {dimension_semantics = [#tpu.dimension_semantics<parallel>, #tpu.dimension_semantics<parallel>], iteration_bounds = array<i64: 1, 1>, scalar_prefetch = 0 : i64, scratch_operands = 0 : i64, tpu.core_type = #tpu.core_type<tc>, window_params = [{transform_indices = @transform_0, window_bounds = array<i64: 2, 256>}, {transform_indices = @transform_1, window_bounds = array<i64: 1, 256>}, {transform_indices = @transform_2, window_bounds = array<i64: 2, 256>}]} {
    %c0 = arith.constant 0 : index
    %c0_0 = arith.constant 0 : index
    %0 = vector.load %arg2[%c0, %c0_0] : memref<2x256xf32, #tpu.memory_space<vmem>>, vector<2x256xf32>
    %c0_1 = arith.constant 0 : index
    %c0_2 = arith.constant 0 : index
    %1 = vector.load %arg3[%c0_1, %c0_2] : memref<1x256xf32, #tpu.memory_space<vmem>>, vector<1x256xf32>
    %2 = vector.broadcast %1 : vector<1x256xf32> to vector<2x256xf32>
    %3 = arith.addf %0, %2 : vector<2x256xf32>
    %c0_3 = arith.constant 0 : index
    %c0_4 = arith.constant 0 : index
    %4 = vector.load %arg4[%c0_3, %c0_4] : memref<2x256xf32, #tpu.memory_space<vmem>>, vector<2x256xf32>
    tpu.vector_store %arg4[%c0_3, %c0_4], %3 {strides = array<i32>} : memref<2x256xf32, #tpu.memory_space<vmem>>, vector<2x256xf32>,
    return
  }
  func.func @transform_0(%arg0: i32, %arg1: i32) -> (i32, i32) {
    %c0_i32 = arith.constant 0 : i32
    return %arg1, %arg0 : i32, i32
  }
  func.func @transform_1(%arg0: i32, %arg1: i32) -> (i32, i32) {
    %c0_i32 = arith.constant 0 : i32
    %c0_i32_0 = arith.constant 0 : i32
    return %c0_i32, %arg0 : i32, i32
  }
  func.func @transform_2(%arg0: i32, %arg1: i32) -> (i32, i32) {
    %c0_i32 = arith.constant 0 : i32
    return %arg1, %arg0 : i32, i32
  }
}

</mosaic_0001>

<llo_original>
// kernel: tpu_custom_call.1
$region0: #{tpu_custom_call.1}
  #allocation0 [shape = 'u32[]', space=smem, size = 0x4, offset = 0x4, fixed_abs, tag = 'smem constant byte address 0x4 - core index']
  #allocation1 [shape = 'u32[144,128]{1,0:T(1,128)}', space=vmem, size = 0x12000, scoped, tag = 'internal scratch']
  %s0 = inlined_call_operand.hbm [shape: f32[2,256], index: 0, kind: input, shape index: {}]
  %s1 = inlined_call_operand.vmem [shape: f32[1,256], index: 1, kind: input, shape index: {}]
  %s2 = inlined_call_operand.hbm [shape: f32[2,256], index: 2, kind: output, shape index: {}]
  %s3 = sld [smem:[#allocation0]]
  $region22: #{tpu_custom_call.1} parent=0
    _
  %s5 = ssub.s32 1, %s3
  %s6 = scalar_select 0, %s5, %s3
  $region1: #{tpu_custom_call.1} parent=0
    #allocation2 [shape = 'u8[2048]{0}', space=vmem, size = 0x800, scoped, tag = 'input window, operand 0, single buffered']
    #allocation3 [shape = 's32[1]{0}', space=sflag, size = 0x4, scoped, tag = 'scoped memory for tpu_custom_call.1']
    #allocation4 [shape = 's32[1]{0}', space=sflag, size = 0x4, scoped, tag = 'scoped memory for tpu_custom_call.1']
    #allocation5 [shape = 'u8[2048]{0}', space=vmem, size = 0x800, scoped, tag = 'output window, operand 0, single buffered']
    %7 = vsyncpa [#allocation3], 0
    %8 = vsyncpa [#allocation4], 0
    // Predicated region
    $region2: #{tpu_custom_call.1} parent=1 // pred_check
      _
    $region3: #{tpu_custom_call.1} parent=1 // pred_check_branch
      %10 = sbr.rel (0) target = $region5
    $region4: #{tpu_custom_call.1} parent=1 // pred_region
      %s12 = ssub.s32 64, 64
      %13 = vsyncadd [#allocation3], %s12
      %s15 = sshll.u32 [#allocation2], 4
      %s16 = int_to_ptr.vmem [resolvable:$true] %s15
      %18 = dma.hbm_to_vmem [thread:$0]  %s0, 64, %s16, [#allocation3]
    $region5: #{tpu_custom_call.1} parent=1 // pred_fallthru
      _
    // Predicated region
    $region6: #{tpu_custom_call.1} parent=1 // pred_check
      _
    $region7: #{tpu_custom_call.1} parent=1 // pred_check_branch
      %20 = sbr.rel (0) target = $region9
    $region8: #{tpu_custom_call.1} parent=1 // pred_region
      _
    $region9: #{tpu_custom_call.1} parent=1 // pred_fallthru
      _
    // Predicated region
    $region10: #{tpu_custom_call.1} parent=1 // pred_check
      _
    $region11: #{tpu_custom_call.1} parent=1 // pred_check_branch
      %22 = sbr.rel (0) target = $region13
    $region12: #{tpu_custom_call.1} parent=1 // pred_region
      %23 = dma.done [#allocation3], 64
    $region13: #{tpu_custom_call.1} parent=1 // pred_fallthru
      _
    %v24 = vld [vmem:[#allocation2] sm:$0xf]
    %v25 = vld [vmem:[%s1] sm:$0x3]
    %v27 = vlaneseq
    %v28 = vshrl.u32 %v27, 7
    %v29 = vsub.s32 0, %v28
    %v30 = vrot.slane %v25, %v29
    %v31 = vlaneseq
    %v32 = vshrl.u32 %v31, 7
    %v33 = vsub.s32 1, %v32
    %v34 = vrot.slane %v25, %v33
    %v35 = vcombine.low %v30, %v34
    %v37 = vunpack.c.l.s4 1983009808
    %v38 = vunpack.c.0.s8 %v37
    %v39 = vlaneseq
    %v40 = vshrl.u32 %v39, 7
    %v41 = vsub.s32 %v38, %v40
    %v42 = vrot.slane %v35, %v41
    %v44 = vadd.f32 %v24, %v42
    %45 = vst [vmem:[#allocation5] sm:$0xf] %v44
    // Predicated region
    $region14: #{tpu_custom_call.1} parent=1 // pred_check
      _
    $region15: #{tpu_custom_call.1} parent=1 // pred_check_branch
      %47 = sbr.rel (0) target = $region17
    $region16: #{tpu_custom_call.1} parent=1 // pred_region
      %s49 = ssub.s32 64, 64
      %50 = vsyncadd [#allocation4], %s49
      %s52 = sshll.u32 [#allocation5], 4
      %s53 = int_to_ptr.vmem [resolvable:$true] %s52
      %55 = dma.vmem_to_hbm [thread:$0]  %s53, 64, %s2, [#allocation4]
    $region17: #{tpu_custom_call.1} parent=1 // pred_fallthru
      _
    // Predicated region
    $region18: #{tpu_custom_call.1} parent=1 // pred_check
      _
    $region19: #{tpu_custom_call.1} parent=1 // pred_check_branch
      %57 = sbr.rel (0) target = $region21
    $region20: #{tpu_custom_call.1} parent=1 // pred_region
      %58 = dma.done [#allocation4], 64
    $region21: #{tpu_custom_call.1} parent=1 // pred_fallthru
      _
    %59 = vsyncpa [#allocation3], 1
    %60 = vsyncpa [#allocation4], 1

</llo_original>
